<compile_context>
chip_gen: v6e
topology: v6e:2x2x1
jax: 0.10.0
libtpu: 0.0.40
codegen_flags: <defaults>
</compile_context>

<pallas_src>
import math

import jax
import jax.numpy as jnp
from jax.experimental import pallas as pl
from jax.experimental.pallas import tpu as pltpu


# ---------------------------------------------------------------------------
# Fused SFT 1x1 kernel: [scale;shift] MLP on cond + modulation of fea
# ---------------------------------------------------------------------------
def _sft_1x1_kernel(fea_ref, cond_ref, w0_ref, b0_ref, w1_ref, b1_ref, out_ref):
    C = out_ref.shape[1]                                   # num_feat
    cond = cond_ref[0].astype(jnp.float32)                 # (R, THW)

    # First 1x1 conv for BOTH branches at once: (2C, R) @ (R, THW)
    h = jnp.dot(w0_ref[...].astype(jnp.float32), cond,
                preferred_element_type=jnp.float32)
    h = h + b0_ref[...].astype(jnp.float32)                # (2C, 1) broadcast
    h = jnp.where(h >= 0, h, 0.01 * h)                     # leaky_relu(0.01)

    # Second 1x1 conv, block-diagonal [Ws1 0; 0 Wh1]: (2C, 2C) @ (2C, THW)
    ss = jnp.dot(w1_ref[...].astype(jnp.float32), h,
                 preferred_element_type=jnp.float32)
    ss = ss + b1_ref[...].astype(jnp.float32)              # (2C, THW)

    scale = ss[:C, :]                                      # (C, THW)
    shift = ss[C:, :]                                      # (C, THW)
    fea = fea_ref[0].astype(jnp.float32)                   # (C, THW)
    out_ref[0] = (fea * scale + shift).astype(out_ref.dtype)


def _pick_pixel_tile(hw, cap=8192):
    """Largest multiple-of-128, <= cap, divisor of the flattened pixel axis."""
    if hw % 128 == 0:
        t = min(cap, hw)
        t -= t % 128
        while t >= 128:
            if hw % t == 0:
                return t
            t -= 128
    return hw  # block dim == full array dim (always legal)


# ---------------------------------------------------------------------------
# Module forward (NCHW in/out, like the PyTorch module)
# ---------------------------------------------------------------------------
@jax.jit
def sft_layer_torch_1x1(fea_nchw, cond_nchw, params):
    N, C, H, W = fea_nchw.shape
    R = cond_nchw.shape[1]
    HW = H * W

    fea2 = fea_nchw.reshape(N, C, HW)      # free reshape, stays NCHW-contiguous
    cond2 = cond_nchw.reshape(N, R, HW)

    # Fuse the two branches into lane/sublane-dense weight slabs.
    w0cat = jnp.concatenate([params["ws0"], params["wh0"]], axis=0)           # (2C, R)
    b0cat = jnp.concatenate([params["bs0"], params["bh0"]], axis=0)[:, None]  # (2C, 1)
    zero = jnp.zeros((C, C), params["ws1"].dtype)
    w1blk = jnp.block([[params["ws1"], zero],
                       [zero, params["wh1"]]])                                # (2C, 2C)
    b1cat = jnp.concatenate([params["bs1"], params["bh1"]], axis=0)[:, None]  # (2C, 1)

    THW = _pick_pixel_tile(HW)
    grid = (N, HW // THW)

    out = pl.pallas_call(
        _sft_1x1_kernel,
        out_shape=jax.ShapeDtypeStruct((N, C, HW), fea_nchw.dtype),
        grid_spec=pltpu.PrefetchScalarGridSpec(
            num_scalar_prefetch=0,
            grid=grid,
            in_specs=[
                pl.BlockSpec((1, C, THW), lambda n, t: (n, 0, t)),   # fea
                pl.BlockSpec((1, R, THW), lambda n, t: (n, 0, t)),   # cond
                pl.BlockSpec((2 * C, R), lambda n, t: (0, 0)),       # W0 [scale;shift]
                pl.BlockSpec((2 * C, 1), lambda n, t: (0, 0)),       # b0
                pl.BlockSpec((2 * C, 2 * C), lambda n, t: (0, 0)),   # W1 block-diag
                pl.BlockSpec((2 * C, 1), lambda n, t: (0, 0)),       # b1
            ],
            out_specs=pl.BlockSpec((1, C, THW), lambda n, t: (n, 0, t)),
        ),
        compiler_params=pltpu.CompilerParams(
            dimension_semantics=("parallel", "parallel"),
            vmem_limit_bytes=64 << 20,
        ),
    )(fea2, cond2, w0cat, b0cat, w1blk, b1cat)

    return out.reshape(N, C, H, W)


# ---------------------------------------------------------------------------
# Pure-JAX reference for validation
# ---------------------------------------------------------------------------
def _ref_forward(fea_nchw, cond_nchw, p):
    def conv1x1(x, w, b):                    # w: (out, in), b: (out,)
        return jnp.einsum("oc,nchw->nohw", w, x) + b[None, :, None, None]

    s = conv1x1(cond_nchw, p["ws0"], p["bs0"])
    s = jnp.where(s >= 0, s, 0.01 * s)
    s = conv1x1(s, p["ws1"], p["bs1"])

    t = conv1x1(cond_nchw, p["wh0"], p["bh0"])
    t = jnp.where(t >= 0, t, 0.01 * t)
    t = conv1x1(t, p["wh1"], p["bh1"])

    return fea_nchw * s + t


# ---------------------------------------------------------------------------
# Deterministic parameter init (matches Conv2d(rep,feat,1)/(feat,feat,1) shapes)
# ---------------------------------------------------------------------------
def init_params(key, num_feat, rep_feat):
    keys = iter(jax.random.split(key, 8))

    def w(k, fan_in, shape):
        bound = 1.0 / math.sqrt(fan_in)
        return jax.random.uniform(k, shape, jnp.float32, -bound, bound)

    return {
        "ws0": w(next(keys), rep_feat, (num_feat, rep_feat)),
        "bs0": w(next(keys), rep_feat, (num_feat,)),
        "ws1": w(next(keys), num_feat, (num_feat, num_feat)),
        "bs1": w(next(keys), num_feat, (num_feat,)),
        "wh0": w(next(keys), rep_feat, (num_feat, rep_feat)),
        "bh0": w(next(keys), rep_feat, (num_feat,)),
        "wh1": w(next(keys), num_feat, (num_feat, num_feat)),
        "bh1": w(next(keys), num_feat, (num_feat,)),
    }


if __name__ == "__main__":
    N, num_feat, rep_feat, H, W = 2, 64, 32, 16, 16
    key = jax.random.PRNGKey(0)
    k_fea, k_cond, k_par = jax.random.split(key, 3)

    fea = jax.random.normal(k_fea, (N, num_feat, H, W), jnp.float32)    # x[0]
    cond = jax.random.normal(k_cond, (N, rep_feat, H, W), jnp.float32)  # x[1]
    params = init_params(k_par, num_feat, rep_feat)

    out = sft_layer_torch_1x1(fea, cond, params)
    jax.block_until_ready(out)

    ref = _ref_forward(fea, cond, params)
    assert out.shape == (N, num_feat, H, W)
    assert jnp.allclose(out, ref, atol=2e-3, rtol=2e-3), (
        float(jnp.max(jnp.abs(out - ref))))
    print("KERNEL_OK")
</pallas_src>

<mosaic_0001>
module attributes {stable_mosaic.version = 11 : i64} {
  func.func @_sft_1x1_kernel(%arg0: i32, %arg1: i32, %arg2: memref<1x64x256xf32, #tpu.memory_space<vmem>>, %arg3: memref<1x32x256xf32, #tpu.memory_space<vmem>>, %arg4: memref<128x32xf32, #tpu.memory_space<vmem>>, %arg5: memref<128x1xf32, #tpu.memory_space<vmem>>, %arg6: memref<128x128xf32, #tpu.memory_space<vmem>>, %arg7: memref<128x1xf32, #tpu.memory_space<vmem>>, %arg8: memref<1x64x256xf32, #tpu.memory_space<vmem>>) attributes {dimension_semantics = [#tpu.dimension_semantics<parallel>, #tpu.dimension_semantics<parallel>], iteration_bounds = array<i64: 2, 1>, scalar_prefetch = 0 : i64, scratch_operands = 0 : i64, tpu.core_type = #tpu.core_type<tc>, window_params = [{transform_indices = @transform_0, window_bounds = array<i64: 1, 64, 256>}, {transform_indices = @transform_1, window_bounds = array<i64: 1, 32, 256>}, {pipeline_mode = #tpu.pipeline_mode<synchronous>, transform_indices = @transform_2, window_bounds = array<i64: 128, 32>}, {pipeline_mode = #tpu.pipeline_mode<synchronous>, transform_indices = @transform_3, window_bounds = array<i64: 128, 1>}, {pipeline_mode = #tpu.pipeline_mode<synchronous>, transform_indices = @transform_4, window_bounds = array<i64: 128, 128>}, {pipeline_mode = #tpu.pipeline_mode<synchronous>, transform_indices = @transform_5, window_bounds = array<i64: 128, 1>}, {transform_indices = @transform_6, window_bounds = array<i64: 1, 64, 256>}]} {
    %c0 = arith.constant 0 : index
    %c0_0 = arith.constant 0 : index
    %c0_1 = arith.constant 0 : index
    %0 = vector.load %arg3[%c0, %c0_0, %c0_1] : memref<1x32x256xf32, #tpu.memory_space<vmem>>, vector<1x32x256xf32>
    %1 = vector.shape_cast %0 : vector<1x32x256xf32> to vector<32x256xf32>
    %c0_2 = arith.constant 0 : index
    %c0_3 = arith.constant 0 : index
    %2 = vector.load %arg4[%c0_2, %c0_3] : memref<128x32xf32, #tpu.memory_space<vmem>>, vector<128x32xf32>
    %cst = arith.constant dense<0.000000e+00> : vector<128x256xf32>
    %3 = tpu.matmul %2, %1, %cst {dimension_numbers = #tpu.dot_dimension_numbers<[1], [0], [0], [1], [0, 0, 1, 1], [], []>} : vector<128x32xf32>, vector<32x256xf32>, vector<128x256xf32> -> vector<128x256xf32>
    %c0_4 = arith.constant 0 : index
    %c0_5 = arith.constant 0 : index
    %4 = vector.load %arg5[%c0_4, %c0_5] : memref<128x1xf32, #tpu.memory_space<vmem>>, vector<128x1xf32>
    %5 = vector.broadcast %4 : vector<128x1xf32> to vector<128x256xf32>
    %6 = arith.addf %3, %5 : vector<128x256xf32>
    %cst_6 = arith.constant 0.000000e+00 : f32
    %7 = vector.broadcast %cst_6 : f32 to vector<128x256xf32>
    %8 = arith.cmpf oge, %6, %7 : vector<128x256xf32>
    %cst_7 = arith.constant 0.00999999977 : f32
    %9 = vector.broadcast %cst_7 : f32 to vector<128x256xf32>
    %10 = arith.mulf %9, %6 : vector<128x256xf32>
    %11 = arith.select %8, %6, %10 : vector<128x256xi1>, vector<128x256xf32>
    %c0_8 = arith.constant 0 : index
    %c0_9 = arith.constant 0 : index
    %12 = vector.load %arg6[%c0_8, %c0_9] : memref<128x128xf32, #tpu.memory_space<vmem>>, vector<128x128xf32>
    %cst_10 = arith.constant dense<0.000000e+00> : vector<128x256xf32>
    %13 = tpu.matmul %12, %11, %cst_10 {dimension_numbers = #tpu.dot_dimension_numbers<[1], [0], [0], [1], [0, 0, 1, 1], [], []>} : vector<128x128xf32>, vector<128x256xf32>, vector<128x256xf32> -> vector<128x256xf32>
    %c0_11 = arith.constant 0 : index
    %c0_12 = arith.constant 0 : index
    %14 = vector.load %arg7[%c0_11, %c0_12] : memref<128x1xf32, #tpu.memory_space<vmem>>, vector<128x1xf32>
    %15 = vector.broadcast %14 : vector<128x1xf32> to vector<128x256xf32>
    %16 = arith.addf %13, %15 : vector<128x256xf32>
    %17 = vector.extract_strided_slice %16 {offsets = [0, 0], sizes = [64, 256], strides = [1, 1]} : vector<128x256xf32> to vector<64x256xf32>
    %18 = vector.extract_strided_slice %16 {offsets = [64, 0], sizes = [64, 256], strides = [1, 1]} : vector<128x256xf32> to vector<64x256xf32>
    %c0_13 = arith.constant 0 : index
    %c0_14 = arith.constant 0 : index
    %c0_15 = arith.constant 0 : index
    %19 = vector.load %arg2[%c0_13, %c0_14, %c0_15] : memref<1x64x256xf32, #tpu.memory_space<vmem>>, vector<1x64x256xf32>
    %20 = vector.shape_cast %19 : vector<1x64x256xf32> to vector<64x256xf32>
    %21 = arith.mulf %20, %17 : vector<64x256xf32>
    %22 = arith.addf %21, %18 : vector<64x256xf32>
    %c0_16 = arith.constant 0 : index
    %c0_17 = arith.constant 0 : index
    %c0_18 = arith.constant 0 : index
    %23 = vector.load %arg8[%c0_16, %c0_17, %c0_18] : memref<1x64x256xf32, #tpu.memory_space<vmem>>, vector<1x64x256xf32>
    %24 = vector.shape_cast %23 : vector<1x64x256xf32> to vector<64x256xf32>
    %25 = vector.shape_cast %22 : vector<64x256xf32> to vector<1x64x256xf32>
    tpu.vector_store %arg8[%c0_16, %c0_17, %c0_18], %25 {strides = array<i32>} : memref<1x64x256xf32, #tpu.memory_space<vmem>>, vector<1x64x256xf32>,
    return
  }
  func.func @transform_0(%arg0: i32, %arg1: i32) -> (i32, i32, i32) {
    %c0_i32 = arith.constant 0 : i32
    %c0_i32_0 = arith.constant 0 : i32
    return %arg0, %c0_i32, %arg1 : i32, i32, i32
  }
  func.func @transform_1(%arg0: i32, %arg1: i32) -> (i32, i32, i32) {
    %c0_i32 = arith.constant 0 : i32
    %c0_i32_0 = arith.constant 0 : i32
    return %arg0, %c0_i32, %arg1 : i32, i32, i32
  }
  func.func @transform_2(%arg0: i32, %arg1: i32) -> (i32, i32) {
    %c0_i32 = arith.constant 0 : i32
    %c0_i32_0 = arith.constant 0 : i32
    %c0_i32_1 = arith.constant 0 : i32
    return %c0_i32, %c0_i32_0 : i32, i32
  }
  func.func @transform_3(%arg0: i32, %arg1: i32) -> (i32, i32) {
    %c0_i32 = arith.constant 0 : i32
    %c0_i32_0 = arith.constant 0 : i32
    %c0_i32_1 = arith.constant 0 : i32
    return %c0_i32, %c0_i32_0 : i32, i32
  }
  func.func @transform_4(%arg0: i32, %arg1: i32) -> (i32, i32) {
    %c0_i32 = arith.constant 0 : i32
    %c0_i32_0 = arith.constant 0 : i32
    %c0_i32_1 = arith.constant 0 : i32
    return %c0_i32, %c0_i32_0 : i32, i32
  }
  func.func @transform_5(%arg0: i32, %arg1: i32) -> (i32, i32) {
    %c0_i32 = arith.constant 0 : i32
    %c0_i32_0 = arith.constant 0 : i32
    %c0_i32_1 = arith.constant 0 : i32
    return %c0_i32, %c0_i32_0 : i32, i32
  }
  func.func @transform_6(%arg0: i32, %arg1: i32) -> (i32, i32, i32) {
    %c0_i32 = arith.constant 0 : i32
    %c0_i32_0 = arith.constant 0 : i32
    return %arg0, %c0_i32, %arg1 : i32, i32, i32
  }
}

</mosaic_0001>

<llo_original>
// kernel: sft_layer_torch_1x1.1
$region0: #{sft_layer_torch_1x1.1}
  #allocation0 [shape = 'u32[]', space=smem, size = 0x4, offset = 0x4, fixed_abs, tag = 'smem constant byte address 0x4 - core index']
  #allocation1 [shape = 'u32[144,128]{1,0:T(1,128)}', space=vmem, size = 0x12000, scoped, tag = 'internal scratch']
  %s0 = inlined_call_operand.vmem [shape: f32[2,64,256], index: 0, kind: input, shape index: {}]
  %s1 = inlined_call_operand.vmem [shape: f32[2,32,256], index: 1, kind: input, shape index: {}]
  %s2 = inlined_call_operand.vmem [shape: f32[128,32], index: 2, kind: input, shape index: {}]
  %s3 = inlined_call_operand.vmem [shape: f32[128,1], index: 3, kind: input, shape index: {}]
  %s4 = inlined_call_operand.vmem [shape: f32[128,128], index: 4, kind: input, shape index: {}]
  %s5 = inlined_call_operand.vmem [shape: f32[128,1], index: 5, kind: input, shape index: {}]
  %s6 = inlined_call_operand.vmem [shape: f32[2,64,256], index: 6, kind: output, shape index: {}]
  %s7 = sld [smem:[#allocation0]]
  $region57: #{sft_layer_torch_1x1.1} parent=0
    _
  %s9 = ssub.s32 1, %s7
  %s10 = scalar_select 0, %s9, %s7
  loop: start=0, step=1, limit=4
  $region2: #{sft_layer_torch_1x1.1} parent=0 // loop_pre_header
    _
  $region3: #{sft_layer_torch_1x1.1} parent=0 // loop_header
    %s12 = sphi 0, %s16
    %p13 = scmp.ge.s32.totalorder %s12, 4
    %s19 = sphi 0, %s31
    %s20 = sphi 0, %s27
    %s21 = sphi 0, %s19
    %s22 = sphi 0, %s20
    %s23 = sphi 0, %s21
    %s24 = sphi 0, %s22
    %s36 = sphi 0, %s38
    %s39 = sphi 0, %s36
    %s40 = sphi 0, %s39
    %s56 = sphi 0, %s40
    %s64 = sphi 0, %s66
    %s67 = sphi 0, %s64
    %s68 = sphi 0, %s67
    %s84 = sphi 0, %s68
    %s88 = sphi 0, %s88
    %s90 = sphi 0, %s88
    %s91 = sphi 0, %s90
    %s105 = sphi 0, %s91
    %s109 = sphi 0, %s109
    %s111 = sphi 0, %s109
    %s112 = sphi 0, %s111
    %s126 = sphi 0, %s112
    %s130 = sphi 0, %s130
    %s132 = sphi 0, %s130
    %s133 = sphi 0, %s132
    %s147 = sphi 0, %s133
    %s151 = sphi 0, %s151
    %s153 = sphi 0, %s151
    %s154 = sphi 0, %s153
    %s168 = sphi 0, %s154
    %s176 = sphi 0, %s178
    %s179 = sphi 0, %s176
    %s180 = sphi 0, %s179
    %s196 = sphi 0, %s180
  $region4: #{sft_layer_torch_1x1.1} parent=0 // loop_header_branch
    %15 = sbr.rel (%p13) target = $region8
  $region5: #{sft_layer_torch_1x1.1} parent=0 // loop_body
    %s17 = ssub.s32 %s12, 1
    %s18 = ssub.s32 %s12, 2
    %s25 = sadd.s32 1, %s20
    %p26 = scmp.ge.s32.totalorder %s25, 1
    %s27 = scalar_select %p26, 0, %s25
    %s28 = sadd.s32 1, %s19
    %s29 = scalar_select %p26, %s28, %s19
    %p30 = scmp.ge.s32.totalorder %s29, 2
    %s31 = scalar_select %p30, 0, %s29
    %s32 = ssub.s32 %s19, %s31
    %s33 = ssub.s32 %s20, %s27
    %s34 = sor.u32 %s32, %s33
    %p35 = scmp.eq.s32.totalorder %s34, 0
    %s37 = sadd.s32 %s36, 1
    %s38 = scalar_select %p35, %s36, %s37
    %p41 = pneg %p35
    %p42 = scmp.eq.s32.totalorder %s12, 1
    %p43 = por %p41, %p42
    %p44 = scmp.ne.s32.totalorder %s36, %s39
    %p45 = scmp.eq.s32.totalorder %s12, 0
    %p46 = por %p44, %p45
    %p47 = scmp.ne.s32.totalorder %s36, %s39
    %p48 = scmp.eq.s32.totalorder %s17, 1
    %p49 = por %p47, %p48
    %p50 = scmp.ne.s32.totalorder %s39, %s40
    %p51 = scmp.eq.s32.totalorder %s17, 0
    %p52 = por %p50, %p51
    %p53 = scmp.ne.s32.totalorder %s39, %s40
    %p54 = scmp.eq.s32.totalorder %s18, 1
    %p55 = por %p53, %p54
    %p57 = scmp.ne.s32.totalorder %s40, %s56
    %p58 = scmp.eq.s32.totalorder %s18, 0
    %p59 = por %p57, %p58
    %s60 = ssub.s32 %s19, %s31
    %s61 = ssub.s32 %s20, %s27
    %s62 = sor.u32 %s60, %s61
    %p63 = scmp.eq.s32.totalorder %s62, 0
    %s65 = sadd.s32 %s64, 1
    %s66 = scalar_select %p63, %s64, %s65
    %p69 = pneg %p63
    %p70 = scmp.eq.s32.totalorder %s12, 1
    %p71 = por %p69, %p70
    %p72 = scmp.ne.s32.totalorder %s64, %s67
    %p73 = scmp.eq.s32.totalorder %s12, 0
    %p74 = por %p72, %p73
    %p75 = scmp.ne.s32.totalorder %s64, %s67
    %p76 = scmp.eq.s32.totalorder %s17, 1
    %p77 = por %p75, %p76
    %p78 = scmp.ne.s32.totalorder %s67, %s68
    %p79 = scmp.eq.s32.totalorder %s17, 0
    %p80 = por %p78, %p79
    %p81 = scmp.ne.s32.totalorder %s67, %s68
    %p82 = scmp.eq.s32.totalorder %s18, 1
    %p83 = por %p81, %p82
    %p85 = scmp.ne.s32.totalorder %s68, %s84
    %p86 = scmp.eq.s32.totalorder %s18, 0
    %p87 = por %p85, %p86
    %s89 = sadd.s32 %s88, 1
    %p92 = scmp.eq.s32.totalorder %s12, 1
    %p93 = scmp.ne.s32.totalorder %s88, %s90
    %p94 = scmp.eq.s32.totalorder %s12, 0
    %p95 = por %p93, %p94
    %p96 = scmp.ne.s32.totalorder %s88, %s90
    %p97 = scmp.eq.s32.totalorder %s17, 1
    %p98 = por %p96, %p97
    %p99 = scmp.ne.s32.totalorder %s90, %s91
    %p100 = scmp.eq.s32.totalorder %s17, 0
    %p101 = por %p99, %p100
    %p102 = scmp.ne.s32.totalorder %s90, %s91
    %p103 = scmp.eq.s32.totalorder %s18, 1
    %p104 = por %p102, %p103
    %p106 = scmp.ne.s32.totalorder %s91, %s105
    %p107 = scmp.eq.s32.totalorder %s18, 0
    %p108 = por %p106, %p107
    %s110 = sadd.s32 %s109, 1
    %p113 = scmp.eq.s32.totalorder %s12, 1
    %p114 = scmp.ne.s32.totalorder %s109, %s111
    %p115 = scmp.eq.s32.totalorder %s12, 0
    %p116 = por %p114, %p115
    %p117 = scmp.ne.s32.totalorder %s109, %s111
    %p118 = scmp.eq.s32.totalorder %s17, 1
    %p119 = por %p117, %p118
    %p120 = scmp.ne.s32.totalorder %s111, %s112
    %p121 = scmp.eq.s32.totalorder %s17, 0
    %p122 = por %p120, %p121
    %p123 = scmp.ne.s32.totalorder %s111, %s112
    %p124 = scmp.eq.s32.totalorder %s18, 1
    %p125 = por %p123, %p124
    %p127 = scmp.ne.s32.totalorder %s112, %s126
    %p128 = scmp.eq.s32.totalorder %s18, 0
    %p129 = por %p127, %p128
    %s131 = sadd.s32 %s130, 1
    %p134 = scmp.eq.s32.totalorder %s12, 1
    %p135 = scmp.ne.s32.totalorder %s130, %s132
    %p136 = scmp.eq.s32.totalorder %s12, 0
    %p137 = por %p135, %p136
    %p138 = scmp.ne.s32.totalorder %s130, %s132
    %p139 = scmp.eq.s32.totalorder %s17, 1
    %p140 = por %p138, %p139
    %p141 = scmp.ne.s32.totalorder %s132, %s133
    %p142 = scmp.eq.s32.totalorder %s17, 0
    %p143 = por %p141, %p142
    %p144 = scmp.ne.s32.totalorder %s132, %s133
    %p145 = scmp.eq.s32.totalorder %s18, 1
    %p146 = por %p144, %p145
    %p148 = scmp.ne.s32.totalorder %s133, %s147
    %p149 = scmp.eq.s32.totalorder %s18, 0
    %p150 = por %p148, %p149
    %s152 = sadd.s32 %s151, 1
    %p155 = scmp.eq.s32.totalorder %s12, 1
    %p156 = scmp.ne.s32.totalorder %s151, %s153
    %p157 = scmp.eq.s32.totalorder %s12, 0
    %p158 = por %p156, %p157
    %p159 = scmp.ne.s32.totalorder %s151, %s153
    %p160 = scmp.eq.s32.totalorder %s17, 1
    %p161 = por %p159, %p160
    %p162 = scmp.ne.s32.totalorder %s153, %s154
    %p163 = scmp.eq.s32.totalorder %s17, 0
    %p164 = por %p162, %p163
    %p165 = scmp.ne.s32.totalorder %s153, %s154
    %p166 = scmp.eq.s32.totalorder %s18, 1
    %p167 = por %p165, %p166
    %p169 = scmp.ne.s32.totalorder %s154, %s168
    %p170 = scmp.eq.s32.totalorder %s18, 0
    %p171 = por %p169, %p170
    %s172 = ssub.s32 %s19, %s31
    %s173 = ssub.s32 %s20, %s27
    %s174 = sor.u32 %s172, %s173
    %p175 = scmp.eq.s32.totalorder %s174, 0
    %s177 = sadd.s32 %s176, 1
    %s178 = scalar_select %p175, %s176, %s177
    %p181 = pneg %p175
    %p182 = scmp.eq.s32.totalorder %s12, 1
    %p183 = por %p181, %p182
    %p184 = scmp.ne.s32.totalorder %s176, %s179
    %p185 = scmp.eq.s32.totalorder %s12, 0
    %p186 = por %p184, %p185
    %p187 = scmp.ne.s32.totalorder %s176, %s179
    %p188 = scmp.eq.s32.totalorder %s17, 1
    %p189 = por %p187, %p188
    %p190 = scmp.ne.s32.totalorder %s179, %s180
    %p191 = scmp.eq.s32.totalorder %s17, 0
    %p192 = por %p190, %p191
    %p193 = scmp.ne.s32.totalorder %s179, %s180
    %p194 = scmp.eq.s32.totalorder %s18, 1
    %p195 = por %p193, %p194
    %p197 = scmp.ne.s32.totalorder %s180, %s196
    %p198 = scmp.eq.s32.totalorder %s18, 0
    %p199 = por %p197, %p198
    %p200 = scmp.le.s32.totalorder 1, %s12
    %p201 = scmp.lt.s32.totalorder %s12, 3
    %p202 = pnand %p200, %p201
    %p203 = pneg %p202
    // Predicated region
    $region9: #{sft_layer_torch_1x1.1} parent=5 // pred_check
      _
    $region10: #{sft_layer_torch_1x1.1} parent=5 // pred_check_branch
      %205 = sbr.rel (%p202) target = $region12
    $region11: #{sft_layer_torch_1x1.1} parent=5 // pred_region
      %s206 = ssub.s32 %s12, 1
      // Predicated region
      $region13: #{sft_layer_torch_1x1.1} parent=11 // pred_check
        %p207 = pneg %p101
      $region14: #{sft_layer_torch_1x1.1} parent=11 // pred_check_branch
        %209 = sbr.rel (%p207) target = $region16
      $region15: #{sft_layer_torch_1x1.1} parent=11 // pred_region
        _
      $region16: #{sft_layer_torch_1x1.1} parent=11 // pred_fallthru
        _
      // Predicated region
      $region17: #{sft_layer_torch_1x1.1} parent=11 // pred_check
        %p210 = pneg %p122
      $region18: #{sft_layer_torch_1x1.1} parent=11 // pred_check_branch
        %212 = sbr.rel (%p210) target = $region20
      $region19: #{sft_layer_torch_1x1.1} parent=11 // pred_region
        _
      $region20: #{sft_layer_torch_1x1.1} parent=11 // pred_fallthru
        _
      // Predicated region
      $region21: #{sft_layer_torch_1x1.1} parent=11 // pred_check
        %p213 = pneg %p143
      $region22: #{sft_layer_torch_1x1.1} parent=11 // pred_check_branch
        %215 = sbr.rel (%p213) target = $region24
      $region23: #{sft_layer_torch_1x1.1} parent=11 // pred_region
        _
      $region24: #{sft_layer_torch_1x1.1} parent=11 // pred_fallthru
        _
      // Predicated region
      $region25: #{sft_layer_torch_1x1.1} parent=11 // pred_check
        %p216 = pneg %p164
      $region26: #{sft_layer_torch_1x1.1} parent=11 // pred_check_branch
        %218 = sbr.rel (%p216) target = $region28
      $region27: #{sft_layer_torch_1x1.1} parent=11 // pred_region
        _
      $region28: #{sft_layer_torch_1x1.1} parent=11 // pred_fallthru
        _
    $region12: #{sft_layer_torch_1x1.1} parent=5 // pred_fallthru
      _
    %p219 = scmp.lt.s32.totalorder %s12, 2
    // Predicated region
    $region29: #{sft_layer_torch_1x1.1} parent=5 // pred_check
      %p220 = pneg %p219
    $region30: #{sft_layer_torch_1x1.1} parent=5 // pred_check_branch
      %222 = sbr.rel (%p220) target = $region32
    $region31: #{sft_layer_torch_1x1.1} parent=5 // pred_region
      // Predicated region
      $region33: #{sft_layer_torch_1x1.1} parent=31 // pred_check
        %p223 = pneg %p46
      $region34: #{sft_layer_torch_1x1.1} parent=31 // pred_check_branch
        %225 = sbr.rel (%p223) target = $region36
      $region35: #{sft_layer_torch_1x1.1} parent=31 // pred_region
        %s226 = smul.u32 2, %s20
        %p227 = scmp.lt.s32.totalorder %s19, 1
        %s228 = scalar_select %p227, %s19, 1
        %p229 = scmp.lt.s32.totalorder %s226, 1
        %s230 = scalar_select %p229, %s226, 1
        %s231 = smul.addr %s228, 16
        %s232 = sadd.s32 %s230, %s231
        %s233 = smul.addr %s232, 8
        %s234 = scalar_lea.vmem %s0, %s233
        %s235 = smul.u32 2, %s20
      $region36: #{sft_layer_torch_1x1.1} parent=31 // pred_fallthru
        _
      // Predicated region
      $region37: #{sft_layer_torch_1x1.1} parent=31 // pred_check
        %p236 = pneg %p74
      $region38: #{sft_layer_torch_1x1.1} parent=31 // pred_check_branch
        %238 = sbr.rel (%p236) target = $region40
      $region39: #{sft_layer_torch_1x1.1} parent=31 // pred_region
        %s239 = smul.u32 2, %s20
        %p240 = scmp.lt.s32.totalorder %s19, 1
        %s241 = scalar_select %p240, %s19, 1
        %p242 = scmp.lt.s32.totalorder %s239, 1
        %s243 = scalar_select %p242, %s239, 1
        %s244 = smul.addr %s241, 8
        %s245 = sadd.s32 %s243, %s244
        %s246 = smul.addr %s245, 8
        %s247 = scalar_lea.vmem %s1, %s246
        %s248 = smul.u32 2, %s20
      $region40: #{sft_layer_torch_1x1.1} parent=31 // pred_fallthru
        _
    $region32: #{sft_layer_torch_1x1.1} parent=5 // pred_fallthru
      _
    %p249 = scmp.le.s32.totalorder 1, %s12
    %p250 = scmp.lt.s32.totalorder %s12, 3
    %p251 = pnand %p249, %p250
    %p252 = pneg %p251
    // Predicated region
    $region41: #{sft_layer_torch_1x1.1} parent=5 // pred_check
      _
    $region42: #{sft_layer_torch_1x1.1} parent=5 // pred_check_branch
      %254 = sbr.rel (%p251) target = $region44
    $region43: #{sft_layer_torch_1x1.1} parent=5 // pred_region
      %s255 = ssub.s32 %s12, 1
      %s256 = smul.u32 2, %s22
      %p257 = scmp.lt.s32.totalorder %s21, 1
      %s258 = scalar_select %p257, %s21, 1
      %p259 = scmp.lt.s32.totalorder %s256, 1
      %s260 = scalar_select %p259, %s256, 1
      %s261 = smul.addr %s258, 16
      %s262 = sadd.s32 %s260, %s261
      %s263 = smul.addr %s262, 8
      %s264 = scalar_lea.vmem %s0, %s263
      %p265 = pneg %p52
      %p266 = pneg %p49
      %s267 = smul.u32 2, %s22
      %p268 = scmp.lt.s32.totalorder %s21, 1
      %s269 = scalar_select %p268, %s21, 1
      %p270 = scmp.lt.s32.totalorder %s267, 1
      %s271 = scalar_select %p270, %s267, 1
      %s272 = smul.addr %s269, 8
      %s273 = sadd.s32 %s271, %s272
      %s274 = smul.addr %s273, 8
      %s275 = scalar_lea.vmem %s1, %s274
      %p276 = pneg %p80
      %p277 = pneg %p77
      %p278 = pneg %p101
      %p279 = pneg %p98
      %p280 = pneg %p122
      %p281 = pneg %p119
      %p282 = pneg %p143
      %p283 = pneg %p140
      %p284 = pneg %p164
      %p285 = pneg %p161
      %p286 = pneg %p192
      %p287 = pneg %p189
      %s288 = smul.u32 2, %s22
      %p289 = scmp.lt.s32.totalorder %s21, 1
      %s290 = scalar_select %p289, %s21, 1
      %p291 = scmp.lt.s32.totalorder %s288, 1
      %s292 = scalar_select %p291, %s288, 1
      %s293 = smul.addr %s290, 16
      %s294 = sadd.s32 %s292, %s293
      %s295 = smul.addr %s294, 8
      %s296 = scalar_lea.vmem %s6, %s295
      %s297 = smul.u32 2, %s22
      %p298 = scmp.lt.s32.totalorder %s21, 1
      %s299 = scalar_select %p298, %s21, 1
      %p300 = scmp.lt.s32.totalorder %s297, 1
      %s301 = scalar_select %p300, %s297, 1
      %s302 = smul.addr %s299, 16
      %s303 = sadd.s32 %s301, %s302
      %s304 = smul.addr %s303, 8
      %s305 = scalar_lea.vmem %s0, %s304
      %s306 = smul.u32 2, %s22
      %s307 = smul.u32 2, %s22
      %p308 = scmp.lt.s32.totalorder %s21, 1
      %s309 = scalar_select %p308, %s21, 1
      %p310 = scmp.lt.s32.totalorder %s307, 1
      %s311 = scalar_select %p310, %s307, 1
      %s312 = smul.addr %s309, 8
      %s313 = sadd.s32 %s311, %s312
      %s314 = smul.addr %s313, 8
      %s315 = scalar_lea.vmem %s1, %s314
      %s316 = smul.u32 2, %s22
      %s317 = smul.u32 2, %s22
      %p318 = scmp.lt.s32.totalorder %s21, 1
      %s319 = scalar_select %p318, %s21, 1
      %p320 = scmp.lt.s32.totalorder %s317, 1
      %s321 = scalar_select %p320, %s317, 1
      %s322 = smul.addr %s319, 16
      %s323 = sadd.s32 %s321, %s322
      %s324 = smul.addr %s323, 8
      %s325 = scalar_lea.vmem %s6, %s324
      %s326 = smul.u32 2, %s22
      %v327 = vld [vmem:[%s315] sm:$0xff]
      %v328 = vld [vmem:[%s315 + $0x8] sm:$0xff]
      %v329 = vld [vmem:[%s315 + $0x10] sm:$0xff]
      %v330 = vld [vmem:[%s315 + $0x18] sm:$0xff]
      %v331 = vld [vmem:[%s315 + $0x20] sm:$0xff]
      %v332 = vld [vmem:[%s315 + $0x28] sm:$0xff]
      %v333 = vld [vmem:[%s315 + $0x30] sm:$0xff]
      %v334 = vld [vmem:[%s315 + $0x38] sm:$0xff]
      %v335 = vld [vmem:[%s2] sm:$0xff]
      %v336 = vld [vmem:[%s2 + $0x8] sm:$0xff]
      %v337 = vld [vmem:[%s2 + $0x10] sm:$0xff]
      %v338 = vld [vmem:[%s2 + $0x18] sm:$0xff]
      %v339 = vld [vmem:[%s2 + $0x20] sm:$0xff]
      %v340 = vld [vmem:[%s2 + $0x28] sm:$0xff]
      %v341 = vld [vmem:[%s2 + $0x30] sm:$0xff]
      %v342 = vld [vmem:[%s2 + $0x38] sm:$0xff]
      %v343 = vld [vmem:[%s2 + $0x40] sm:$0xff]
      %v344 = vld [vmem:[%s2 + $0x48] sm:$0xff]
      %v345 = vld [vmem:[%s2 + $0x50] sm:$0xff]
      %v346 = vld [vmem:[%s2 + $0x58] sm:$0xff]
      %v347 = vld [vmem:[%s2 + $0x60] sm:$0xff]
      %v348 = vld [vmem:[%s2 + $0x68] sm:$0xff]
      %v349 = vld [vmem:[%s2 + $0x70] sm:$0xff]
      %v350 = vld [vmem:[%s2 + $0x78] sm:$0xff]
      %v351 = vld [vmem:[%s3] sm:$0xff]
      %v352 = vld [vmem:[%s3 + $0x8] sm:$0xff]
      %v353 = vld [vmem:[%s3 + $0x10] sm:$0xff]
      %v354 = vld [vmem:[%s3 + $0x18] sm:$0xff]
      %v355 = vld [vmem:[%s3 + $0x20] sm:$0xff]
      %v356 = vld [vmem:[%s3 + $0x28] sm:$0xff]
      %v357 = vld [vmem:[%s3 + $0x30] sm:$0xff]
      %v358 = vld [vmem:[%s3 + $0x38] sm:$0xff]
      %v359 = vld [vmem:[%s3 + $0x40] sm:$0xff]
      %v360 = vld [vmem:[%s3 + $0x48] sm:$0xff]
      %v361 = vld [vmem:[%s3 + $0x50] sm:$0xff]
      %v362 = vld [vmem:[%s3 + $0x58] sm:$0xff]
      %v363 = vld [vmem:[%s3 + $0x60] sm:$0xff]
      %v364 = vld [vmem:[%s3 + $0x68] sm:$0xff]
      %v365 = vld [vmem:[%s3 + $0x70] sm:$0xff]
      %v366 = vld [vmem:[%s3 + $0x78] sm:$0xff]
      %368 = vset.pattern.permute.xlu0 0
      %369 = vperm.xlu0 %368, %v351
      %v370 = vpop.permute.xlu0 %369
      %373 = vset.pattern.permute.xlu0 0
      %374 = vperm.xlu0 %373, %v352
      %v375 = vpop.permute.xlu0 %374
      %378 = vset.pattern.permute.xlu0 0
      %379 = vperm.xlu0 %378, %v353
      %v380 = vpop.permute.xlu0 %379
      %383 = vset.pattern.permute.xlu0 0
      %384 = vperm.xlu0 %383, %v354
      %v385 = vpop.permute.xlu0 %384
      %388 = vset.pattern.permute.xlu0 0
      %389 = vperm.xlu0 %388, %v355
      %v390 = vpop.permute.xlu0 %389
      %393 = vset.pattern.permute.xlu0 0
      %394 = vperm.xlu0 %393, %v356
      %v395 = vpop.permute.xlu0 %394
      %398 = vset.pattern.permute.xlu0 0
      %399 = vperm.xlu0 %398, %v357
      %v400 = vpop.permute.xlu0 %399
      %403 = vset.pattern.permute.xlu0 0
      %404 = vperm.xlu0 %403, %v358
      %v405 = vpop.permute.xlu0 %404
      %408 = vset.pattern.permute.xlu0 0
      %409 = vperm.xlu0 %408, %v359
      %v410 = vpop.permute.xlu0 %409
      %413 = vset.pattern.permute.xlu0 0
      %414 = vperm.xlu0 %413, %v360
      %v415 = vpop.permute.xlu0 %414
      %418 = vset.pattern.permute.xlu0 0
      %419 = vperm.xlu0 %418, %v361
      %v420 = vpop.permute.xlu0 %419
      %423 = vset.pattern.permute.xlu0 0
      %424 = vperm.xlu0 %423, %v362
      %v425 = vpop.permute.xlu0 %424
      %428 = vset.pattern.permute.xlu0 0
      %429 = vperm.xlu0 %428, %v363
      %v430 = vpop.permute.xlu0 %429
      %433 = vset.pattern.permute.xlu0 0
      %434 = vperm.xlu0 %433, %v364
      %v435 = vpop.permute.xlu0 %434
      %438 = vset.pattern.permute.xlu0 0
      %439 = vperm.xlu0 %438, %v365
      %v440 = vpop.permute.xlu0 %439
      %443 = vset.pattern.permute.xlu0 0
      %444 = vperm.xlu0 %443, %v366
      %v445 = vpop.permute.xlu0 %444
      %vm447 = vcmask 261120
      %v449 = vsel %vm447, %v335, 0
      %v452 = vsel %vm447, %v336, 0
      %v455 = vsel %vm447, %v337, 0
      %v458 = vsel %vm447, %v338, 0
      %v461 = vsel %vm447, %v339, 0
      %v464 = vsel %vm447, %v340, 0
      %v467 = vsel %vm447, %v341, 0
      %v470 = vsel %vm447, %v342, 0
      %v473 = vsel %vm447, %v343, 0
      %v476 = vsel %vm447, %v344, 0
      %v479 = vsel %vm447, %v345, 0
      %v482 = vsel %vm447, %v346, 0
      %v485 = vsel %vm447, %v347, 0
      %v488 = vsel %vm447, %v348, 0
      %v491 = vsel %vm447, %v349, 0
      %v494 = vsel %vm447, %v350, 0
      %496 = vmatprep.subr.mxu0 0.0
      %497 = vmatpush1.msra.mxu0 0.0
      %498 = vmatprep.subr.mxu0 0.0
      %499 = vmatpush1.msra.mxu0 0.0
      %500 = vmatprep.subr.mxu0 0.0
      %501 = vmatpush1.msra.mxu0 0.0
      %502 = vmatprep.subr.mxu0 0.0
      %503 = vmatpush1.msra.mxu0 0.0
      %504 = vmatprep.subr.mxu0 0.0
      %505 = vmatpush1.msra.mxu0 0.0
      %506 = vmatprep.subr.mxu0 0.0
      %507 = vmatpush1.msra.mxu0 0.0
      %508 = vmatprep.subr.mxu0 0.0
      %509 = vmatpush1.msra.mxu0 0.0
      %510 = vmatprep.subr.mxu0 0.0
      %511 = vmatpush1.msra.mxu0 0.0
      %512 = vmatprep.subr.mxu0 0.0
      %513 = vmatpush1.msra.mxu0 0.0
      %514 = vmatprep.subr.mxu0 0.0
      %515 = vmatpush1.msra.mxu0 0.0
      %516 = vmatprep.subr.mxu0 0.0
      %517 = vmatpush1.msra.mxu0 0.0
      %518 = vmatprep.subr.mxu0 0.0
      %519 = vmatpush1.msra.mxu0 0.0
      %520 = vmatprep.subr.mxu0 %v334
      %521 = vmatpush1.msra.mxu0 %v333
      %522 = vmatprep.subr.mxu0 %v332
      %523 = vmatpush1.msra.mxu0 %v331
      %524 = vmatprep.subr.mxu0 %v330
      %525 = vmatpush1.msra.mxu0 %v329
      %526 = vmatprep.subr.mxu0 %v328
      %527 = vmatpush1.msra.mxu0 %v327
      %528 = vmatprep.subr.mxu0 0.0
      %529 = vmatpush2.msra.mxu0 0.0
      %530 = vmatprep.subr.mxu0 0.0
      %531 = vmatpush2.msra.mxu0 0.0
      %532 = vmatprep.subr.mxu0 0.0
      %533 = vmatpush2.msra.mxu0 0.0
      %534 = vmatprep.subr.mxu0 0.0
      %535 = vmatpush2.msra.mxu0 0.0
      %536 = vmatprep.subr.mxu0 0.0
      %537 = vmatpush2.msra.mxu0 0.0
      %538 = vmatprep.subr.mxu0 0.0
      %539 = vmatpush2.msra.mxu0 0.0
      %540 = vmatprep.subr.mxu0 0.0
      %541 = vmatpush2.msra.mxu0 0.0
      %542 = vmatprep.subr.mxu0 0.0
      %543 = vmatpush2.msra.mxu0 0.0
      %544 = vmatprep.subr.mxu0 0.0
      %545 = vmatpush2.msra.mxu0 0.0
      %546 = vmatprep.subr.mxu0 0.0
      %547 = vmatpush2.msra.mxu0 0.0
      %548 = vmatprep.subr.mxu0 0.0
      %549 = vmatpush2.msra.mxu0 0.0
      %550 = vmatprep.subr.mxu0 0.0
      %551 = vmatpush2.msra.mxu0 0.0
      %552 = vmatprep.subr.mxu0 0.0
      %553 = vmatpush2.msra.mxu0 0.0
      %554 = vmatprep.subr.mxu0 0.0
      %555 = vmatpush2.msra.mxu0 0.0
      %556 = vmatprep.subr.mxu0 0.0
      %557 = vmatpush2.msra.mxu0 0.0
      %558 = vmatprep.subr.mxu0 0.0
      %559 = vmatpush2.msra.mxu0 0.0
      %560 = vmatprep.mubr.f32.mxu0 0.0
      %561 = vmatmul.mubr.f32.gmra.mxu0 %v449
      %v562 = vpop.f32.mrf.mxu0
      %v563 = vadd.f32 %v370, %v562
      %v564 = vpop.f32.mrf.mxu0
      %v565 = vadd.f32 %v370, %v564
      %566 = vmatprep.mubr.f32.mxu0 0.0
      %567 = vmatmul.mubr.f32.gmra.mxu0 %v452
      %v568 = vpop.f32.mrf.mxu0
      %v569 = vadd.f32 %v375, %v568
      %v570 = vpop.f32.mrf.mxu0
      %v571 = vadd.f32 %v375, %v570
      %572 = vmatprep.mubr.f32.mxu0 0.0
      %573 = vmatmul.mubr.f32.gmra.mxu0 %v455
      %v574 = vpop.f32.mrf.mxu0
      %v575 = vadd.f32 %v380, %v574
      %v576 = vpop.f32.mrf.mxu0
      %v577 = vadd.f32 %v380, %v576
      %578 = vmatprep.mubr.f32.mxu0 0.0
      %579 = vmatmul.mubr.f32.gmra.mxu0 %v458
      %v580 = vpop.f32.mrf.mxu0
      %v581 = vadd.f32 %v385, %v580
      %v582 = vpop.f32.mrf.mxu0
      %v583 = vadd.f32 %v385, %v582
      %584 = vmatprep.mubr.f32.mxu0 0.0
      %585 = vmatmul.mubr.f32.gmra.mxu0 %v461
      %v586 = vpop.f32.mrf.mxu0
      %v587 = vadd.f32 %v390, %v586
      %v588 = vpop.f32.mrf.mxu0
      %v589 = vadd.f32 %v390, %v588
      %590 = vmatprep.mubr.f32.mxu0 0.0
      %591 = vmatmul.mubr.f32.gmra.mxu0 %v464
      %v592 = vpop.f32.mrf.mxu0
      %v593 = vadd.f32 %v395, %v592
      %v594 = vpop.f32.mrf.mxu0
      %v595 = vadd.f32 %v395, %v594
      %596 = vmatprep.mubr.f32.mxu0 0.0
      %597 = vmatmul.mubr.f32.gmra.mxu0 %v467
      %v598 = vpop.f32.mrf.mxu0
      %v599 = vadd.f32 %v400, %v598
      %v600 = vpop.f32.mrf.mxu0
      %v601 = vadd.f32 %v400, %v600
      %602 = vmatprep.mubr.f32.mxu0 0.0
      %603 = vmatmul.mubr.f32.gmra.mxu0 %v470
      %v604 = vpop.f32.mrf.mxu0
      %v605 = vadd.f32 %v405, %v604
      %v606 = vpop.f32.mrf.mxu0
      %v607 = vadd.f32 %v405, %v606
      %608 = vmatprep.mubr.f32.mxu0 0.0
      %609 = vmatmul.mubr.f32.gmra.mxu0 %v473
      %v610 = vpop.f32.mrf.mxu0
      %v611 = vadd.f32 %v410, %v610
      %v612 = vpop.f32.mrf.mxu0
      %v613 = vadd.f32 %v410, %v612
      %614 = vmatprep.mubr.f32.mxu0 0.0
      %615 = vmatmul.mubr.f32.gmra.mxu0 %v476
      %v616 = vpop.f32.mrf.mxu0
      %v617 = vadd.f32 %v415, %v616
      %v618 = vpop.f32.mrf.mxu0
      %v619 = vadd.f32 %v415, %v618
      %620 = vmatprep.mubr.f32.mxu0 0.0
      %621 = vmatmul.mubr.f32.gmra.mxu0 %v479
      %v622 = vpop.f32.mrf.mxu0
      %v623 = vadd.f32 %v420, %v622
      %v624 = vpop.f32.mrf.mxu0
      %v625 = vadd.f32 %v420, %v624
      %626 = vmatprep.mubr.f32.mxu0 0.0
      %627 = vmatmul.mubr.f32.gmra.mxu0 %v482
      %v628 = vpop.f32.mrf.mxu0
      %v629 = vadd.f32 %v425, %v628
      %v630 = vpop.f32.mrf.mxu0
      %v631 = vadd.f32 %v425, %v630
      %632 = vmatprep.mubr.f32.mxu0 0.0
      %633 = vmatmul.mubr.f32.gmra.mxu0 %v485
      %v634 = vpop.f32.mrf.mxu0
      %v635 = vadd.f32 %v430, %v634
      %v636 = vpop.f32.mrf.mxu0
      %v637 = vadd.f32 %v430, %v636
      %638 = vmatprep.mubr.f32.mxu0 0.0
      %639 = vmatmul.mubr.f32.gmra.mxu0 %v488
      %v640 = vpop.f32.mrf.mxu0
      %v641 = vadd.f32 %v435, %v640
      %v642 = vpop.f32.mrf.mxu0
      %v643 = vadd.f32 %v435, %v642
      %644 = vmatprep.mubr.f32.mxu0 0.0
      %645 = vmatmul.mubr.f32.gmra.mxu0 %v491
      %v646 = vpop.f32.mrf.mxu0
      %v647 = vadd.f32 %v440, %v646
      %v648 = vpop.f32.mrf.mxu0
      %v649 = vadd.f32 %v440, %v648
      %650 = vmatprep.mubr.f32.mxu0 0.0
      %651 = vmatmul.mubr.f32.gmra.mxu0 %v494
      %v652 = vpop.f32.mrf.mxu0
      %v653 = vadd.f32 %v445, %v652
      %v654 = vpop.f32.mrf.mxu0
      %v655 = vadd.f32 %v445, %v654
      %656 = vdwg.mxu0
      %vm657 = vcmp.ge.f32.partialorder %v563, 0.0
      %vm658 = vcmp.ge.f32.partialorder %v565, 0.0
      %vm659 = vcmp.ge.f32.partialorder %v569, 0.0
      %vm660 = vcmp.ge.f32.partialorder %v571, 0.0
      %vm661 = vcmp.ge.f32.partialorder %v575, 0.0
      %vm662 = vcmp.ge.f32.partialorder %v577, 0.0
      %vm663 = vcmp.ge.f32.partialorder %v581, 0.0
      %vm664 = vcmp.ge.f32.partialorder %v583, 0.0
      %vm665 = vcmp.ge.f32.partialorder %v587, 0.0
      %vm666 = vcmp.ge.f32.partialorder %v589, 0.0
      %vm667 = vcmp.ge.f32.partialorder %v593, 0.0
      %vm668 = vcmp.ge.f32.partialorder %v595, 0.0
      %vm669 = vcmp.ge.f32.partialorder %v599, 0.0
      %vm670 = vcmp.ge.f32.partialorder %v601, 0.0
      %vm671 = vcmp.ge.f32.partialorder %v605, 0.0
      %vm672 = vcmp.ge.f32.partialorder %v607, 0.0
      %vm673 = vcmp.ge.f32.partialorder %v611, 0.0
      %vm674 = vcmp.ge.f32.partialorder %v613, 0.0
      %vm675 = vcmp.ge.f32.partialorder %v617, 0.0
      %vm676 = vcmp.ge.f32.partialorder %v619, 0.0
      %vm677 = vcmp.ge.f32.partialorder %v623, 0.0
      %vm678 = vcmp.ge.f32.partialorder %v625, 0.0
      %vm679 = vcmp.ge.f32.partialorder %v629, 0.0
      %vm680 = vcmp.ge.f32.partialorder %v631, 0.0
      %vm681 = vcmp.ge.f32.partialorder %v635, 0.0
      %vm682 = vcmp.ge.f32.partialorder %v637, 0.0
      %vm683 = vcmp.ge.f32.partialorder %v641, 0.0
      %vm684 = vcmp.ge.f32.partialorder %v643, 0.0
      %vm685 = vcmp.ge.f32.partialorder %v647, 0.0
      %vm686 = vcmp.ge.f32.partialorder %v649, 0.0
      %vm687 = vcmp.ge.f32.partialorder %v653, 0.0
      %vm688 = vcmp.ge.f32.partialorder %v655, 0.0
      %v689 = vmul.f32 %v563, 0.01
      %v690 = vmul.f32 %v565, 0.01
      %v691 = vmul.f32 %v569, 0.01
      %v692 = vmul.f32 %v571, 0.01
      %v693 = vmul.f32 %v575, 0.01
      %v694 = vmul.f32 %v577, 0.01
      %v695 = vmul.f32 %v581, 0.01
      %v696 = vmul.f32 %v583, 0.01
      %v697 = vmul.f32 %v587, 0.01
      %v698 = vmul.f32 %v589, 0.01
      %v699 = vmul.f32 %v593, 0.01
      %v700 = vmul.f32 %v595, 0.01
      %v701 = vmul.f32 %v599, 0.01
      %v702 = vmul.f32 %v601, 0.01
      %v703 = vmul.f32 %v605, 0.01
      %v704 = vmul.f32 %v607, 0.01
      %v705 = vmul.f32 %v611, 0.01
      %v706 = vmul.f32 %v613, 0.01
      %v707 = vmul.f32 %v617, 0.01
      %v708 = vmul.f32 %v619, 0.01
      %v709 = vmul.f32 %v623, 0.01
      %v710 = vmul.f32 %v625, 0.01
      %v711 = vmul.f32 %v629, 0.01
      %v712 = vmul.f32 %v631, 0.01
      %v713 = vmul.f32 %v635, 0.01
      %v714 = vmul.f32 %v637, 0.01
      %v715 = vmul.f32 %v641, 0.01
      %v716 = vmul.f32 %v643, 0.01
      %v717 = vmul.f32 %v647, 0.01
      %v718 = vmul.f32 %v649, 0.01
      %v719 = vmul.f32 %v653, 0.01
      %v720 = vmul.f32 %v655, 0.01
      %v721 = vsel %vm657, %v563, %v689
      %v722 = vsel %vm658, %v565, %v690
      %v723 = vsel %vm659, %v569, %v691
      %v724 = vsel %vm660, %v571, %v692
      %v725 = vsel %vm661, %v575, %v693
      %v726 = vsel %vm662, %v577, %v694
      %v727 = vsel %vm663, %v581, %v695
      %v728 = vsel %vm664, %v583, %v696
      %v729 = vsel %vm665, %v587, %v697
      %v730 = vsel %vm666, %v589, %v698
      %v731 = vsel %vm667, %v593, %v699
      %v732 = vsel %vm668, %v595, %v700
      %v733 = vsel %vm669, %v599, %v701
      %v734 = vsel %vm670, %v601, %v702
      %v735 = vsel %vm671, %v605, %v703
      %v736 = vsel %vm672, %v607, %v704
      %v737 = vsel %vm673, %v611, %v705
      %v738 = vsel %vm674, %v613, %v706
      %v739 = vsel %vm675, %v617, %v707
      %v740 = vsel %vm676, %v619, %v708
      %v741 = vsel %vm677, %v623, %v709
      %v742 = vsel %vm678, %v625, %v710
      %v743 = vsel %vm679, %v629, %v711
      %v744 = vsel %vm680, %v631, %v712
      %v745 = vsel %vm681, %v635, %v713
      %v746 = vsel %vm682, %v637, %v714
      %v747 = vsel %vm683, %v641, %v715
      %v748 = vsel %vm684, %v643, %v716
      %v749 = vsel %vm685, %v647, %v717
      %v750 = vsel %vm686, %v649, %v718
      %v751 = vsel %vm687, %v653, %v719
      %v752 = vsel %vm688, %v655, %v720
      %v753 = vld [vmem:[%s4] sm:$0xff]
      %v754 = vld [vmem:[%s4 + $0x8] sm:$0xff]
      %v755 = vld [vmem:[%s4 + $0x10] sm:$0xff]
      %v756 = vld [vmem:[%s4 + $0x18] sm:$0xff]
      %v757 = vld [vmem:[%s4 + $0x20] sm:$0xff]
      %v758 = vld [vmem:[%s4 + $0x28] sm:$0xff]
      %v759 = vld [vmem:[%s4 + $0x30] sm:$0xff]
      %v760 = vld [vmem:[%s4 + $0x38] sm:$0xff]
      %v761 = vld [vmem:[%s4 + $0x40] sm:$0xff]
      %v762 = vld [vmem:[%s4 + $0x48] sm:$0xff]
      %v763 = vld [vmem:[%s4 + $0x50] sm:$0xff]
      %v764 = vld [vmem:[%s4 + $0x58] sm:$0xff]
      %v765 = vld [vmem:[%s4 + $0x60] sm:$0xff]
      %v766 = vld [vmem:[%s4 + $0x68] sm:$0xff]
      %v767 = vld [vmem:[%s4 + $0x70] sm:$0xff]
      %v768 = vld [vmem:[%s4 + $0x78] sm:$0xff]
      %v769 = vld [vmem:[%s5] sm:$0xff]
      %v770 = vld [vmem:[%s5 + $0x8] sm:$0xff]
      %v771 = vld [vmem:[%s5 + $0x10] sm:$0xff]
      %v772 = vld [vmem:[%s5 + $0x18] sm:$0xff]
      %v773 = vld [vmem:[%s5 + $0x20] sm:$0xff]
      %v774 = vld [vmem:[%s5 + $0x28] sm:$0xff]
      %v775 = vld [vmem:[%s5 + $0x30] sm:$0xff]
      %v776 = vld [vmem:[%s5 + $0x38] sm:$0xff]
      %v777 = vld [vmem:[%s5 + $0x40] sm:$0xff]
      %v778 = vld [vmem:[%s5 + $0x48] sm:$0xff]
      %v779 = vld [vmem:[%s5 + $0x50] sm:$0xff]
      %v780 = vld [vmem:[%s5 + $0x58] sm:$0xff]
      %v781 = vld [vmem:[%s5 + $0x60] sm:$0xff]
      %v782 = vld [vmem:[%s5 + $0x68] sm:$0xff]
      %v783 = vld [vmem:[%s5 + $0x70] sm:$0xff]
      %v784 = vld [vmem:[%s5 + $0x78] sm:$0xff]
      %786 = vset.pattern.permute.xlu0 0
      %787 = vperm.xlu0 %786, %v769
      %v788 = vpop.permute.xlu0 %787
      %791 = vset.pattern.permute.xlu0 0
      %792 = vperm.xlu0 %791, %v770
      %v793 = vpop.permute.xlu0 %792
      %796 = vset.pattern.permute.xlu0 0
      %797 = vperm.xlu0 %796, %v771
      %v798 = vpop.permute.xlu0 %797
      %801 = vset.pattern.permute.xlu0 0
      %802 = vperm.xlu0 %801, %v772
      %v803 = vpop.permute.xlu0 %802
      %806 = vset.pattern.permute.xlu0 0
      %807 = vperm.xlu0 %806, %v773
      %v808 = vpop.permute.xlu0 %807
      %811 = vset.pattern.permute.xlu0 0
      %812 = vperm.xlu0 %811, %v774
      %v813 = vpop.permute.xlu0 %812
      %816 = vset.pattern.permute.xlu0 0
      %817 = vperm.xlu0 %816, %v775
      %v818 = vpop.permute.xlu0 %817
      %821 = vset.pattern.permute.xlu0 0
      %822 = vperm.xlu0 %821, %v776
      %v823 = vpop.permute.xlu0 %822
      %826 = vset.pattern.permute.xlu0 0
      %827 = vperm.xlu0 %826, %v777
      %v828 = vpop.permute.xlu0 %827
      %831 = vset.pattern.permute.xlu0 0
      %832 = vperm.xlu0 %831, %v778
      %v833 = vpop.permute.xlu0 %832
      %836 = vset.pattern.permute.xlu0 0
      %837 = vperm.xlu0 %836, %v779
      %v838 = vpop.permute.xlu0 %837
      %841 = vset.pattern.permute.xlu0 0
      %842 = vperm.xlu0 %841, %v780
      %v843 = vpop.permute.xlu0 %842
      %846 = vset.pattern.permute.xlu0 0
      %847 = vperm.xlu0 %846, %v781
      %v848 = vpop.permute.xlu0 %847
      %851 = vset.pattern.permute.xlu0 0
      %852 = vperm.xlu0 %851, %v782
      %v853 = vpop.permute.xlu0 %852
      %856 = vset.pattern.permute.xlu0 0
      %857 = vperm.xlu0 %856, %v783
      %v858 = vpop.permute.xlu0 %857
      %861 = vset.pattern.permute.xlu0 0
      %862 = vperm.xlu0 %861, %v784
      %v863 = vpop.permute.xlu0 %862
      %865 = vmatprep.subr.mxu0 %v752
      %866 = vmatpush1.msra.mxu0 %v751
      %867 = vmatprep.subr.mxu0 %v750
      %868 = vmatpush1.msra.mxu0 %v749
      %869 = vmatprep.subr.mxu0 %v748
      %870 = vmatpush1.msra.mxu0 %v747
      %871 = vmatprep.subr.mxu0 %v746
      %872 = vmatpush1.msra.mxu0 %v745
      %873 = vmatprep.subr.mxu0 %v744
      %874 = vmatpush1.msra.mxu0 %v743
      %875 = vmatprep.subr.mxu0 %v742
      %876 = vmatpush1.msra.mxu0 %v741
      %877 = vmatprep.subr.mxu0 %v740
      %878 = vmatpush1.msra.mxu0 %v739
      %879 = vmatprep.subr.mxu0 %v738
      %880 = vmatpush1.msra.mxu0 %v737
      %881 = vmatprep.subr.mxu0 %v736
      %882 = vmatpush1.msra.mxu0 %v735
      %883 = vmatprep.subr.mxu0 %v734
      %884 = vmatpush1.msra.mxu0 %v733
      %885 = vmatprep.subr.mxu0 %v732
      %886 = vmatpush1.msra.mxu0 %v731
      %887 = vmatprep.subr.mxu0 %v730
      %888 = vmatpush1.msra.mxu0 %v729
      %889 = vmatprep.subr.mxu0 %v728
      %890 = vmatpush1.msra.mxu0 %v727
      %891 = vmatprep.subr.mxu0 %v726
      %892 = vmatpush1.msra.mxu0 %v725
      %893 = vmatprep.subr.mxu0 %v724
      %894 = vmatpush1.msra.mxu0 %v723
      %895 = vmatprep.subr.mxu0 %v722
      %896 = vmatpush1.msra.mxu0 %v721
      %897 = vmatprep.subr.mxu0 0.0
      %898 = vmatpush2.msra.mxu0 0.0
      %899 = vmatprep.subr.mxu0 0.0
      %900 = vmatpush2.msra.mxu0 0.0
      %901 = vmatprep.subr.mxu0 0.0
      %902 = vmatpush2.msra.mxu0 0.0
      %903 = vmatprep.subr.mxu0 0.0
      %904 = vmatpush2.msra.mxu0 0.0
      %905 = vmatprep.subr.mxu0 0.0
      %906 = vmatpush2.msra.mxu0 0.0
      %907 = vmatprep.subr.mxu0 0.0
      %908 = vmatpush2.msra.mxu0 0.0
      %909 = vmatprep.subr.mxu0 0.0
      %910 = vmatpush2.msra.mxu0 0.0
      %911 = vmatprep.subr.mxu0 0.0
      %912 = vmatpush2.msra.mxu0 0.0
      %913 = vmatprep.subr.mxu0 0.0
      %914 = vmatpush2.msra.mxu0 0.0
      %915 = vmatprep.subr.mxu0 0.0
      %916 = vmatpush2.msra.mxu0 0.0
      %917 = vmatprep.subr.mxu0 0.0
      %918 = vmatpush2.msra.mxu0 0.0
      %919 = vmatprep.subr.mxu0 0.0
      %920 = vmatpush2.msra.mxu0 0.0
      %921 = vmatprep.subr.mxu0 0.0
      %922 = vmatpush2.msra.mxu0 0.0
      %923 = vmatprep.subr.mxu0 0.0
      %924 = vmatpush2.msra.mxu0 0.0
      %925 = vmatprep.subr.mxu0 0.0
      %926 = vmatpush2.msra.mxu0 0.0
      %927 = vmatprep.subr.mxu0 0.0
      %928 = vmatpush2.msra.mxu0 0.0
      %929 = vmatprep.mubr.f32.mxu0 0.0
      %930 = vmatmul.mubr.f32.gmra.mxu0 %v753
      %v931 = vpop.f32.mrf.mxu0
      %v932 = vadd.f32 %v788, %v931
      %v933 = vpop.f32.mrf.mxu0
      %v934 = vadd.f32 %v788, %v933
      %935 = vmatprep.mubr.f32.mxu0 0.0
      %936 = vmatmul.mubr.f32.gmra.mxu0 %v754
      %v937 = vpop.f32.mrf.mxu0
      %v938 = vadd.f32 %v793, %v937
      %v939 = vpop.f32.mrf.mxu0
      %v940 = vadd.f32 %v793, %v939
      %941 = vmatprep.mubr.f32.mxu0 0.0
      %942 = vmatmul.mubr.f32.gmra.mxu0 %v755
      %v943 = vpop.f32.mrf.mxu0
      %v944 = vadd.f32 %v798, %v943
      %v945 = vpop.f32.mrf.mxu0
      %v946 = vadd.f32 %v798, %v945
      %947 = vmatprep.mubr.f32.mxu0 0.0
      %948 = vmatmul.mubr.f32.gmra.mxu0 %v756
      %v949 = vpop.f32.mrf.mxu0
      %v950 = vadd.f32 %v803, %v949
      %v951 = vpop.f32.mrf.mxu0
      %v952 = vadd.f32 %v803, %v951
      %953 = vmatprep.mubr.f32.mxu0 0.0
      %954 = vmatmul.mubr.f32.gmra.mxu0 %v757
      %v955 = vpop.f32.mrf.mxu0
      %v956 = vadd.f32 %v808, %v955
      %v957 = vpop.f32.mrf.mxu0
      %v958 = vadd.f32 %v808, %v957
      %959 = vmatprep.mubr.f32.mxu0 0.0
      %960 = vmatmul.mubr.f32.gmra.mxu0 %v758
      %v961 = vpop.f32.mrf.mxu0
      %v962 = vadd.f32 %v813, %v961
      %v963 = vpop.f32.mrf.mxu0
      %v964 = vadd.f32 %v813, %v963
      %965 = vmatprep.mubr.f32.mxu0 0.0
      %966 = vmatmul.mubr.f32.gmra.mxu0 %v759
      %v967 = vpop.f32.mrf.mxu0
      %v968 = vadd.f32 %v818, %v967
      %v969 = vpop.f32.mrf.mxu0
      %v970 = vadd.f32 %v818, %v969
      %971 = vmatprep.mubr.f32.mxu0 0.0
      %972 = vmatmul.mubr.f32.gmra.mxu0 %v760
      %v973 = vpop.f32.mrf.mxu0
      %v974 = vadd.f32 %v823, %v973
      %v975 = vpop.f32.mrf.mxu0
      %v976 = vadd.f32 %v823, %v975
      %977 = vmatprep.mubr.f32.mxu0 0.0
      %978 = vmatmul.mubr.f32.gmra.mxu0 %v761
      %v979 = vpop.f32.mrf.mxu0
      %v980 = vadd.f32 %v828, %v979
      %v981 = vpop.f32.mrf.mxu0
      %v982 = vadd.f32 %v828, %v981
      %983 = vmatprep.mubr.f32.mxu0 0.0
      %984 = vmatmul.mubr.f32.gmra.mxu0 %v762
      %v985 = vpop.f32.mrf.mxu0
      %v986 = vadd.f32 %v833, %v985
      %v987 = vpop.f32.mrf.mxu0
      %v988 = vadd.f32 %v833, %v987
      %989 = vmatprep.mubr.f32.mxu0 0.0
      %990 = vmatmul.mubr.f32.gmra.mxu0 %v763
      %v991 = vpop.f32.mrf.mxu0
      %v992 = vadd.f32 %v838, %v991
      %v993 = vpop.f32.mrf.mxu0
      %v994 = vadd.f32 %v838, %v993
      %995 = vmatprep.mubr.f32.mxu0 0.0
      %996 = vmatmul.mubr.f32.gmra.mxu0 %v764
      %v997 = vpop.f32.mrf.mxu0
      %v998 = vadd.f32 %v843, %v997
      %v999 = vpop.f32.mrf.mxu0
      %v1000 = vadd.f32 %v843, %v999
      %1001 = vmatprep.mubr.f32.mxu0 0.0
      %1002 = vmatmul.mubr.f32.gmra.mxu0 %v765
      %v1003 = vpop.f32.mrf.mxu0
      %v1004 = vadd.f32 %v848, %v1003
      %v1005 = vpop.f32.mrf.mxu0
      %v1006 = vadd.f32 %v848, %v1005
      %1007 = vmatprep.mubr.f32.mxu0 0.0
      %1008 = vmatmul.mubr.f32.gmra.mxu0 %v766
      %v1009 = vpop.f32.mrf.mxu0
      %v1010 = vadd.f32 %v853, %v1009
      %v1011 = vpop.f32.mrf.mxu0
      %v1012 = vadd.f32 %v853, %v1011
      %1013 = vmatprep.mubr.f32.mxu0 0.0
      %1014 = vmatmul.mubr.f32.gmra.mxu0 %v767
      %v1015 = vpop.f32.mrf.mxu0
      %v1016 = vadd.f32 %v858, %v1015
      %v1017 = vpop.f32.mrf.mxu0
      %v1018 = vadd.f32 %v858, %v1017
      %1019 = vmatprep.mubr.f32.mxu0 0.0
      %1020 = vmatmul.mubr.f32.gmra.mxu0 %v768
      %v1021 = vpop.f32.mrf.mxu0
      %v1022 = vadd.f32 %v863, %v1021
      %v1023 = vpop.f32.mrf.mxu0
      %v1024 = vadd.f32 %v863, %v1023
      %1025 = vdwg.mxu0
      %v1026 = vld [vmem:[%s305] sm:$0xff]
      %v1027 = vld [vmem:[%s305 + $0x8] sm:$0xff]
      %v1028 = vld [vmem:[%s305 + $0x10] sm:$0xff]
      %v1029 = vld [vmem:[%s305 + $0x18] sm:$0xff]
      %v1030 = vld [vmem:[%s305 + $0x20] sm:$0xff]
      %v1031 = vld [vmem:[%s305 + $0x28] sm:$0xff]
      %v1032 = vld [vmem:[%s305 + $0x30] sm:$0xff]
      %v1033 = vld [vmem:[%s305 + $0x38] sm:$0xff]
      %v1034 = vld [vmem:[%s305 + $0x40] sm:$0xff]
      %v1035 = vld [vmem:[%s305 + $0x48] sm:$0xff]
      %v1036 = vld [vmem:[%s305 + $0x50] sm:$0xff]
      %v1037 = vld [vmem:[%s305 + $0x58] sm:$0xff]
      %v1038 = vld [vmem:[%s305 + $0x60] sm:$0xff]
      %v1039 = vld [vmem:[%s305 + $0x68] sm:$0xff]
      %v1040 = vld [vmem:[%s305 + $0x70] sm:$0xff]
      %v1041 = vld [vmem:[%s305 + $0x78] sm:$0xff]
      %v1042 = vmul.f32 %v1026, %v932
      %v1043 = vmul.f32 %v1027, %v934
      %v1044 = vmul.f32 %v1028, %v938
      %v1045 = vmul.f32 %v1029, %v940
      %v1046 = vmul.f32 %v1030, %v944
      %v1047 = vmul.f32 %v1031, %v946
      %v1048 = vmul.f32 %v1032, %v950
      %v1049 = vmul.f32 %v1033, %v952
      %v1050 = vmul.f32 %v1034, %v956
      %v1051 = vmul.f32 %v1035, %v958
      %v1052 = vmul.f32 %v1036, %v962
      %v1053 = vmul.f32 %v1037, %v964
      %v1054 = vmul.f32 %v1038, %v968
      %v1055 = vmul.f32 %v1039, %v970
      %v1056 = vmul.f32 %v1040, %v974
      %v1057 = vmul.f32 %v1041, %v976
      %v1058 = vadd.f32 %v1042, %v980
      %v1059 = vadd.f32 %v1043, %v982
      %v1060 = vadd.f32 %v1044, %v986
      %v1061 = vadd.f32 %v1045, %v988
      %v1062 = vadd.f32 %v1046, %v992
      %v1063 = vadd.f32 %v1047, %v994
      %v1064 = vadd.f32 %v1048, %v998
      %v1065 = vadd.f32 %v1049, %v1000
      %v1066 = vadd.f32 %v1050, %v1004
      %v1067 = vadd.f32 %v1051, %v1006
      %v1068 = vadd.f32 %v1052, %v1010
      %v1069 = vadd.f32 %v1053, %v1012
      %v1070 = vadd.f32 %v1054, %v1016
      %v1071 = vadd.f32 %v1055, %v1018
      %v1072 = vadd.f32 %v1056, %v1022
      %v1073 = vadd.f32 %v1057, %v1024
      %1074 = vst [vmem:[%s325] sm:$0xff] %v1058
      %1075 = vst [vmem:[%s325 + $0x8] sm:$0xff] %v1059
      %1076 = vst [vmem:[%s325 + $0x10] sm:$0xff] %v1060
      %1077 = vst [vmem:[%s325 + $0x18] sm:$0xff] %v1061
      %1078 = vst [vmem:[%s325 + $0x20] sm:$0xff] %v1062
      %1079 = vst [vmem:[%s325 + $0x28] sm:$0xff] %v1063
      %1080 = vst [vmem:[%s325 + $0x30] sm:$0xff] %v1064
      %1081 = vst [vmem:[%s325 + $0x38] sm:$0xff] %v1065
      %1082 = vst [vmem:[%s325 + $0x40] sm:$0xff] %v1066
      %1083 = vst [vmem:[%s325 + $0x48] sm:$0xff] %v1067
      %1084 = vst [vmem:[%s325 + $0x50] sm:$0xff] %v1068
      %1085 = vst [vmem:[%s325 + $0x58] sm:$0xff] %v1069
      %1086 = vst [vmem:[%s325 + $0x60] sm:$0xff] %v1070
      %1087 = vst [vmem:[%s325 + $0x68] sm:$0xff] %v1071
      %1088 = vst [vmem:[%s325 + $0x70] sm:$0xff] %v1072
      %1089 = vst [vmem:[%s325 + $0x78] sm:$0xff] %v1073
      %s1090 = smul.u32 2, %s22
      %p1091 = scmp.lt.s32.totalorder %s21, 1
      %s1092 = scalar_select %p1091, %s21, 1
      %p1093 = scmp.lt.s32.totalorder %s1090, 1
      %s1094 = scalar_select %p1093, %s1090, 1
      %s1095 = smul.addr %s1092, 16
      %s1096 = sadd.s32 %s1094, %s1095
      %s1097 = smul.addr %s1096, 8
      %s1098 = scalar_lea.vmem %s6, %s1097
      // Predicated region
      $region45: #{sft_layer_torch_1x1.1} parent=43 // pred_check
        %p1099 = pneg %p189
      $region46: #{sft_layer_torch_1x1.1} parent=43 // pred_check_branch
        %1101 = sbr.rel (%p1099) target = $region48
      $region47: #{sft_layer_torch_1x1.1} parent=43 // pred_region
        %s1102 = smul.u32 2, %s22
      $region48: #{sft_layer_torch_1x1.1} parent=43 // pred_fallthru
        _
    $region44: #{sft_layer_torch_1x1.1} parent=5 // pred_fallthru
      _
    %p1103 = scmp.le.s32.totalorder 2, %s12
    // Predicated region
    $region49: #{sft_layer_torch_1x1.1} parent=5 // pred_check
      %p1104 = pneg %p1103
    $region50: #{sft_layer_torch_1x1.1} parent=5 // pred_check_branch
      %1106 = sbr.rel (%p1104) target = $region52
    $region51: #{sft_layer_torch_1x1.1} parent=5 // pred_region
      %s1107 = ssub.s32 %s12, 2
      // Predicated region
      $region53: #{sft_layer_torch_1x1.1} parent=51 // pred_check
        %p1108 = pneg %p195
      $region54: #{sft_layer_torch_1x1.1} parent=51 // pred_check_branch
        %1110 = sbr.rel (%p1108) target = $region56
      $region55: #{sft_layer_torch_1x1.1} parent=51 // pred_region
        %s1111 = smul.u32 2, %s24
        %p1112 = scmp.lt.s32.totalorder %s23, 1
        %s1113 = scalar_select %p1112, %s23, 1
        %p1114 = scmp.lt.s32.totalorder %s1111, 1
        %s1115 = scalar_select %p1114, %s1111, 1
        %s1116 = smul.addr %s1113, 16
        %s1117 = sadd.s32 %s1115, %s1116
        %s1118 = smul.addr %s1117, 8
        %s1119 = scalar_lea.vmem %s6, %s1118
      $region56: #{sft_layer_torch_1x1.1} parent=51 // pred_fallthru
        _
    $region52: #{sft_layer_torch_1x1.1} parent=5 // pred_fallthru
      _
  $region6: #{sft_layer_torch_1x1.1} parent=0 // loop_footer
    %s16 = sadd.s32 1, %s12
  $region7: #{sft_layer_torch_1x1.1} parent=0 // loop_footer_branch
    %11 = sbr.rel target = $region3
  $region8: #{sft_layer_torch_1x1.1} parent=0 // loop_exit
    _

</llo_original>
